<compile_context>
chip_gen: v7x
topology: tpu7x:2x2x1
jax: 0.10.0
libtpu: 0.0.40
codegen_flags: <defaults>
</compile_context>

<pallas_src>
import jax
import jax.numpy as jnp
from jax import lax
from jax.experimental import pallas as pl
from jax.experimental.pallas import tpu as pltpu


def class_block_kernel(x_ref, w_ref, b_ref, o_ref):
    """LeakyReLU(0.1) -> (dropout: identity at eval) -> Linear."""
    x = x_ref[...]
    # LeakyReLU, negative_slope = 0.1 (VPU elementwise, rides under the MXU)
    x = jnp.where(x >= 0, x, 0.1 * x)
    # Linear: contract x (TB, D) with weight (C_pad, D) on dim 1 of both
    # -> (TB, C_pad); f32 accumulation on the MXU.
    acc = lax.dot_general(
        x, w_ref[...],
        dimension_numbers=(((1,), (1,)), ((), ())),
        preferred_element_type=jnp.float32,
    )
    o_ref[...] = (acc + b_ref[...]).astype(o_ref.dtype)


def _round_up(n, m):
    return ((n + m - 1) // m) * m


def class_block_forward(x, weight, bias, *, block_b=512):
    """x: (B, D) float32, weight: (C, D) float32, bias: (C,) float32."""
    B, D = x.shape
    C = weight.shape[0]

    # Lane-dense output: pad class dim to a multiple of 128.
    C_pad = _round_up(C, 128)
    # Batch tile: multiple of 8 (sublanes), capped at block_b (fits well
    # under the 32 MiB scoped-VMEM default even on v7x for these sizes).
    TB = min(_round_up(block_b, 8), _round_up(max(B, 8), 8))
    B_pad = _round_up(max(B, TB), TB)

    x_p = x if B_pad == B else jnp.pad(x, ((0, B_pad - B), (0, 0)))
    w_p = weight if C_pad == C else jnp.pad(weight, ((0, C_pad - C), (0, 0)))
    b_p = bias if C_pad == C else jnp.pad(bias, (0, C_pad - C))
    b2 = b_p.reshape(1, C_pad)

    grid = (B_pad // TB,)

    itemsize = jnp.dtype(x.dtype).itemsize
    cost = pl.CostEstimate(
        flops=2 * B_pad * D * C_pad,
        transcendentals=0,
        bytes_accessed=(x_p.size + w_p.size + b2.size + B_pad * C_pad) * itemsize,
    )

    out = pl.pallas_call(
        class_block_kernel,
        out_shape=jax.ShapeDtypeStruct((B_pad, C_pad), x.dtype),
        grid_spec=pltpu.PrefetchScalarGridSpec(
            num_scalar_prefetch=0,
            grid=grid,
            in_specs=[
                # x tile marches over the batch; double-buffered by Pallas.
                pl.BlockSpec((TB, D), lambda i: (i, 0)),
                # weight / bias: constant block index -> resident in VMEM.
                pl.BlockSpec((C_pad, D), lambda i: (0, 0)),
                pl.BlockSpec((1, C_pad), lambda i: (0, 0)),
            ],
            out_specs=pl.BlockSpec((TB, C_pad), lambda i: (i, 0)),
        ),
        compiler_params=pltpu.CompilerParams(
            dimension_semantics=("parallel",),
        ),
        cost_estimate=cost,
    )(x_p, w_p, b2)

    # Strip batch / class padding before anything downstream (softmax/argmax).
    return out[:B, :C]


if __name__ == "__main__":
    # Small shapes consistent with the module: batch=8, input_dim=128, class_num=32
    B, input_dim, class_num = 8, 128, 32

    key = jax.random.PRNGKey(0)
    kx, kw = jax.random.split(key)

    x = jax.random.normal(kx, (B, input_dim), dtype=jnp.float32)

    # weights_init_classifier: Linear.weight ~ N(0, 0.001), Linear.bias = 0
    weight = 0.001 * jax.random.normal(kw, (class_num, input_dim), dtype=jnp.float32)
    bias = jnp.zeros((class_num,), dtype=jnp.float32)

    out = class_block_forward(x, weight, bias)
    out = jax.block_until_ready(out)

    # Reference check in plain JAX (eval-mode dropout == identity)
    x_act = jnp.where(x >= 0, x, 0.1 * x)
    ref = x_act @ weight.T + bias
    assert out.shape == (B, class_num)
    assert jnp.allclose(out, ref, atol=1e-5, rtol=1e-5)

    print("KERNEL_OK")
</pallas_src>

<mosaic_0001>
module attributes {stable_mosaic.version = 11 : i64} {
  func.func @class_block_kernel(%arg0: i32, %arg1: memref<8x128xf32, #tpu.memory_space<vmem>>, %arg2: memref<128x128xf32, #tpu.memory_space<vmem>>, %arg3: memref<1x128xf32, #tpu.memory_space<vmem>>, %arg4: memref<8x128xf32, #tpu.memory_space<vmem>>) attributes {dimension_semantics = [#tpu.dimension_semantics<parallel>], iteration_bounds = array<i64: 1>, scalar_prefetch = 0 : i64, scratch_operands = 0 : i64, tpu.core_type = #tpu.core_type<tc>, window_params = [{transform_indices = @transform_0, window_bounds = array<i64: 8, 128>}, {pipeline_mode = #tpu.pipeline_mode<synchronous>, transform_indices = @transform_1, window_bounds = array<i64: 128, 128>}, {pipeline_mode = #tpu.pipeline_mode<synchronous>, transform_indices = @transform_2, window_bounds = array<i64: 1, 128>}, {transform_indices = @transform_3, window_bounds = array<i64: 8, 128>}]} {
    %c0 = arith.constant 0 : index
    %c0_0 = arith.constant 0 : index
    %0 = vector.load %arg1[%c0, %c0_0] : memref<8x128xf32, #tpu.memory_space<vmem>>, vector<8x128xf32>
    %cst = arith.constant 0.000000e+00 : f32
    %1 = vector.broadcast %cst : f32 to vector<8x128xf32>
    %2 = arith.cmpf oge, %0, %1 : vector<8x128xf32>
    %cst_1 = arith.constant 1.000000e-01 : f32
    %3 = vector.broadcast %cst_1 : f32 to vector<8x128xf32>
    %4 = arith.mulf %3, %0 : vector<8x128xf32>
    %5 = arith.select %2, %0, %4 : vector<8x128xi1>, vector<8x128xf32>
    %c0_2 = arith.constant 0 : index
    %c0_3 = arith.constant 0 : index
    %6 = vector.load %arg2[%c0_2, %c0_3] : memref<128x128xf32, #tpu.memory_space<vmem>>, vector<128x128xf32>
    %cst_4 = arith.constant dense<0.000000e+00> : vector<8x128xf32>
    %7 = tpu.matmul %5, %6, %cst_4 {dimension_numbers = #tpu.dot_dimension_numbers<[1], [1], [0], [0], [0, 0, 1, 0], [], []>} : vector<8x128xf32>, vector<128x128xf32>, vector<8x128xf32> -> vector<8x128xf32>
    %c0_5 = arith.constant 0 : index
    %c0_6 = arith.constant 0 : index
    %8 = vector.load %arg3[%c0_5, %c0_6] : memref<1x128xf32, #tpu.memory_space<vmem>>, vector<1x128xf32>
    %9 = vector.broadcast %8 : vector<1x128xf32> to vector<8x128xf32>
    %10 = arith.addf %7, %9 : vector<8x128xf32>
    %c0_7 = arith.constant 0 : index
    %c0_8 = arith.constant 0 : index
    %11 = vector.load %arg4[%c0_7, %c0_8] : memref<8x128xf32, #tpu.memory_space<vmem>>, vector<8x128xf32>
    tpu.vector_store %arg4[%c0_7, %c0_8], %10 {strides = array<i32>} : memref<8x128xf32, #tpu.memory_space<vmem>>, vector<8x128xf32>,
    return
  }
  func.func @transform_0(%arg0: i32) -> (i32, i32) {
    %c0_i32 = arith.constant 0 : i32
    %c0_i32_0 = arith.constant 0 : i32
    return %arg0, %c0_i32 : i32, i32
  }
  func.func @transform_1(%arg0: i32) -> (i32, i32) {
    %c0_i32 = arith.constant 0 : i32
    %c0_i32_0 = arith.constant 0 : i32
    %c0_i32_1 = arith.constant 0 : i32
    return %c0_i32, %c0_i32_0 : i32, i32
  }
  func.func @transform_2(%arg0: i32) -> (i32, i32) {
    %c0_i32 = arith.constant 0 : i32
    %c0_i32_0 = arith.constant 0 : i32
    %c0_i32_1 = arith.constant 0 : i32
    return %c0_i32, %c0_i32_0 : i32, i32
  }
  func.func @transform_3(%arg0: i32) -> (i32, i32) {
    %c0_i32 = arith.constant 0 : i32
    %c0_i32_0 = arith.constant 0 : i32
    return %arg0, %c0_i32 : i32, i32
  }
}

</mosaic_0001>

<llo_original>
// kernel: tpu_custom_call.1
$region0: #{tpu_custom_call.1}
  #allocation0 [shape = 'u32[]', space=smem, size = 0x4, offset = 0x4, fixed_abs, tag = 'smem constant byte address 0x4 - core index']
  #allocation1 [shape = 'u32[144,128]{1,0:T(1,128)}', space=vmem, size = 0x12000, scoped, tag = 'internal scratch']
  %s0 = inlined_call_operand.hbm [shape: f32[8,128], index: 0, kind: input, shape index: {}]
  %s1 = inlined_call_operand.hbm [shape: f32[128,128], index: 1, kind: input, shape index: {}]
  %s2 = inlined_call_operand.vmem [shape: f32[1,128], index: 2, kind: input, shape index: {}]
  %s3 = inlined_call_operand.hbm [shape: f32[8,128], index: 3, kind: output, shape index: {}]
  %s4 = sld [smem:[#allocation0]]
  $region30: #{tpu_custom_call.1} parent=0
    _
  %s6 = ssub.s32 1, %s4
  %s7 = scalar_select 0, %s6, %s4
  $region1: #{tpu_custom_call.1} parent=0
    #allocation2 [shape = 'u8[4096]{0}', space=vmem, size = 0x1000, scoped, tag = 'input window, operand 0, single buffered']
    #allocation3 [shape = 's32[1]{0}', space=sflag, size = 0x4, scoped, tag = 'scoped memory for tpu_custom_call.1']
    #allocation4 [shape = 's32[1]{0}', space=sflag, size = 0x4, scoped, tag = 'scoped memory for tpu_custom_call.1']
    #allocation5 [shape = 'u8[65536]{0}', space=vmem, size = 0x10000, scoped, tag = 'input window, operand 1, single buffered']
    #allocation6 [shape = 's32[1]{0}', space=sflag, size = 0x4, scoped, tag = 'scoped memory for tpu_custom_call.1']
    #allocation7 [shape = 'u8[4096]{0}', space=vmem, size = 0x1000, scoped, tag = 'output window, operand 0, single buffered']
    %8 = vsyncpa [#allocation3], 0
    %9 = vsyncpa [#allocation6], 0
    %10 = vsyncpa [#allocation4], 0
    // Predicated region
    $region2: #{tpu_custom_call.1} parent=1 // pred_check
      _
    $region3: #{tpu_custom_call.1} parent=1 // pred_check_branch
      %12 = sbr.rel (0) target = $region5
    $region4: #{tpu_custom_call.1} parent=1 // pred_region
      %s14 = ssub.s32 128, 128
      %15 = vsyncadd [#allocation3], %s14
      %s17 = sshll.u32 [#allocation2], 4
      %s18 = int_to_ptr.vmem [resolvable:$true] %s17
      %20 = dma.hbm_to_vmem [thread:$0]  %s0, 128, %s18, [#allocation3]
    $region5: #{tpu_custom_call.1} parent=1 // pred_fallthru
      _
    // Predicated region
    $region6: #{tpu_custom_call.1} parent=1 // pred_check
      _
    $region7: #{tpu_custom_call.1} parent=1 // pred_check_branch
      %22 = sbr.rel (0) target = $region9
    $region8: #{tpu_custom_call.1} parent=1 // pred_region
      %s24 = ssub.s32 2048, 2048
      %25 = vsyncadd [#allocation6], %s24
      %s26 = sshll.u32 [#allocation5], 4
      %s27 = int_to_ptr.vmem [resolvable:$true] %s26
      %32 = dma.hbm_to_vmem [thread:$0]  %s1, 2048, %s27, [#allocation6], 128, 128, 8
    $region9: #{tpu_custom_call.1} parent=1 // pred_fallthru
      _
    // Predicated region
    $region10: #{tpu_custom_call.1} parent=1 // pred_check
      _
    $region11: #{tpu_custom_call.1} parent=1 // pred_check_branch
      %34 = sbr.rel (0) target = $region13
    $region12: #{tpu_custom_call.1} parent=1 // pred_region
      _
    $region13: #{tpu_custom_call.1} parent=1 // pred_fallthru
      _
    // Predicated region
    $region14: #{tpu_custom_call.1} parent=1 // pred_check
      _
    $region15: #{tpu_custom_call.1} parent=1 // pred_check_branch
      %36 = sbr.rel (0) target = $region17
    $region16: #{tpu_custom_call.1} parent=1 // pred_region
      %37 = dma.done [#allocation3], 128
    $region17: #{tpu_custom_call.1} parent=1 // pred_fallthru
      _
    // Predicated region
    $region18: #{tpu_custom_call.1} parent=1 // pred_check
      _
    $region19: #{tpu_custom_call.1} parent=1 // pred_check_branch
      %39 = sbr.rel (0) target = $region21
    $region20: #{tpu_custom_call.1} parent=1 // pred_region
      %40 = dma.done [#allocation6], 2048
    $region21: #{tpu_custom_call.1} parent=1 // pred_fallthru
      _
    %v41 = vld [vmem:[#allocation2] sm:$0xff]
    %vm42 = vcmp.ge.f32.partialorder %v41, 0.0
    %v43 = vmul.f32 %v41, 0.1
    %v44 = vsel %vm42, %v41, %v43
    %v45 = vld [vmem:[#allocation5] sm:$0xff]
    %v46 = vld [vmem:[#allocation5 + $0x8] sm:$0xff]
    %v47 = vld [vmem:[#allocation5 + $0x10] sm:$0xff]
    %v48 = vld [vmem:[#allocation5 + $0x18] sm:$0xff]
    %v49 = vld [vmem:[#allocation5 + $0x20] sm:$0xff]
    %v50 = vld [vmem:[#allocation5 + $0x28] sm:$0xff]
    %v51 = vld [vmem:[#allocation5 + $0x30] sm:$0xff]
    %v52 = vld [vmem:[#allocation5 + $0x38] sm:$0xff]
    %v53 = vld [vmem:[#allocation5 + $0x40] sm:$0xff]
    %v54 = vld [vmem:[#allocation5 + $0x48] sm:$0xff]
    %v55 = vld [vmem:[#allocation5 + $0x50] sm:$0xff]
    %v56 = vld [vmem:[#allocation5 + $0x58] sm:$0xff]
    %v57 = vld [vmem:[#allocation5 + $0x60] sm:$0xff]
    %v58 = vld [vmem:[#allocation5 + $0x68] sm:$0xff]
    %v59 = vld [vmem:[#allocation5 + $0x70] sm:$0xff]
    %v60 = vld [vmem:[#allocation5 + $0x78] sm:$0xff]
    %v61 = vld [vmem:[%s2] sm:$0x1]
    %v63 = vlaneseq
    %v64 = vshrl.u32 %v63, 7
    %v65 = vsub.s32 0, %v64
    %v66 = vrot.slane %v61, %v65
    %68 = vmatprep.subr.mxu0 0.0
    %69 = vmatpush1.xpose.msra.mxu0 %v45
    %70 = vmatprep.subr.mxu0 0.0
    %71 = vmatpush1.xpose.msra.mxu0 %v46
    %72 = vmatprep.subr.mxu0 0.0
    %73 = vmatpush1.xpose.msra.mxu0 %v47
    %74 = vmatprep.subr.mxu0 0.0
    %75 = vmatpush1.xpose.msra.mxu0 %v48
    %76 = vmatprep.subr.mxu0 0.0
    %77 = vmatpush1.xpose.msra.mxu0 %v49
    %78 = vmatprep.subr.mxu0 0.0
    %79 = vmatpush1.xpose.msra.mxu0 %v50
    %80 = vmatprep.subr.mxu0 0.0
    %81 = vmatpush1.xpose.msra.mxu0 %v51
    %82 = vmatprep.subr.mxu0 0.0
    %83 = vmatpush1.xpose.msra.mxu0 %v52
    %84 = vmatprep.subr.mxu0 0.0
    %85 = vmatpush1.xpose.msra.mxu0 %v53
    %86 = vmatprep.subr.mxu0 0.0
    %87 = vmatpush1.xpose.msra.mxu0 %v54
    %88 = vmatprep.subr.mxu0 0.0
    %89 = vmatpush1.xpose.msra.mxu0 %v55
    %90 = vmatprep.subr.mxu0 0.0
    %91 = vmatpush1.xpose.msra.mxu0 %v56
    %92 = vmatprep.subr.mxu0 0.0
    %93 = vmatpush1.xpose.msra.mxu0 %v57
    %94 = vmatprep.subr.mxu0 0.0
    %95 = vmatpush1.xpose.msra.mxu0 %v58
    %96 = vmatprep.subr.mxu0 0.0
    %97 = vmatpush1.xpose.msra.mxu0 %v59
    %98 = vmatprep.subr.mxu0 0.0
    %99 = vmatpush1.xpose.msra.mxu0 %v60
    %100 = vmatprep.subr.mxu0 0.0
    %101 = vmatpush1.xpose.msra.mxu0 0.0
    %102 = vmatprep.subr.mxu0 0.0
    %103 = vmatpush1.xpose.msra.mxu0 0.0
    %104 = vmatprep.subr.mxu0 0.0
    %105 = vmatpush1.xpose.msra.mxu0 0.0
    %106 = vmatprep.subr.mxu0 0.0
    %107 = vmatpush1.xpose.msra.mxu0 0.0
    %108 = vmatprep.subr.mxu0 0.0
    %109 = vmatpush1.xpose.msra.mxu0 0.0
    %110 = vmatprep.subr.mxu0 0.0
    %111 = vmatpush1.xpose.msra.mxu0 0.0
    %112 = vmatprep.subr.mxu0 0.0
    %113 = vmatpush1.xpose.msra.mxu0 0.0
    %114 = vmatprep.subr.mxu0 0.0
    %115 = vmatpush1.xpose.msra.mxu0 0.0
    %116 = vmatprep.subr.mxu0 0.0
    %117 = vmatpush1.xpose.msra.mxu0 0.0
    %118 = vmatprep.subr.mxu0 0.0
    %119 = vmatpush1.xpose.msra.mxu0 0.0
    %120 = vmatprep.subr.mxu0 0.0
    %121 = vmatpush1.xpose.msra.mxu0 0.0
    %122 = vmatprep.subr.mxu0 0.0
    %123 = vmatpush1.xpose.msra.mxu0 0.0
    %124 = vmatprep.subr.mxu0 0.0
    %125 = vmatpush1.xpose.msra.mxu0 0.0
    %126 = vmatprep.subr.mxu0 0.0
    %127 = vmatpush1.xpose.msra.mxu0 0.0
    %128 = vmatprep.subr.mxu0 0.0
    %129 = vmatpush1.xpose.msra.mxu0 0.0
    %130 = vmatprep.subr.mxu0 0.0
    %131 = vmatpush1.xpose.msra.mxu0 0.0
    %132 = vmatprep.mubr.f32.mxu0 0.0
    %133 = vmatmul.mubr.f32.gmra.mrb[0].mxu0 %v44
    %v134 = vpop.f32.mrb[0].mxu0
    %v135 = vadd.f32 %v66, %v134
    %v136 = vpop.f32.mrb[0].mxu0
    %137 = vdwg.mxu0
    %138 = vst [vmem:[#allocation7] sm:$0xff] %v135
    // Predicated region
    $region22: #{tpu_custom_call.1} parent=1 // pred_check
      _
    $region23: #{tpu_custom_call.1} parent=1 // pred_check_branch
      %140 = sbr.rel (0) target = $region25
    $region24: #{tpu_custom_call.1} parent=1 // pred_region
      %s142 = ssub.s32 128, 128
      %143 = vsyncadd [#allocation4], %s142
      %s145 = sshll.u32 [#allocation7], 4
      %s146 = int_to_ptr.vmem [resolvable:$true] %s145
      %148 = dma.vmem_to_hbm [thread:$0]  %s146, 128, %s3, [#allocation4]
    $region25: #{tpu_custom_call.1} parent=1 // pred_fallthru
      _
    // Predicated region
    $region26: #{tpu_custom_call.1} parent=1 // pred_check
      _
    $region27: #{tpu_custom_call.1} parent=1 // pred_check_branch
      %150 = sbr.rel (0) target = $region29
    $region28: #{tpu_custom_call.1} parent=1 // pred_region
      %151 = dma.done [#allocation4], 128
    $region29: #{tpu_custom_call.1} parent=1 // pred_fallthru
      _
    %152 = vsyncpa [#allocation3], 1
    %153 = vsyncpa [#allocation6], 1
    %154 = vsyncpa [#allocation4], 1

</llo_original>
